<compile_context>
chip_gen: v6e
topology: v6e:2x2x1
jax: 0.10.0
libtpu: 0.0.40
codegen_flags: <defaults>
</compile_context>

<pallas_src>
import math

import jax
import jax.numpy as jnp
from jax import lax
from jax.experimental import pallas as pl
from jax.experimental.pallas import tpu as pltpu

_NEG_INF = -1e30  # large finite negative; avoids NaN even if a row were fully masked


def _head_kernel(xq_ref, xkv_ref, wk_ref, wq_ref, wv_ref, o_ref,
                 q_scr, m_scr, l_scr, acc_scr):
    # xq_ref : (TQ, C)  x rows for this Q tile (bf16)
    # xkv_ref: (TK, C)  x rows for this KV tile (bf16)
    # w*_ref : (C, H)   projection weights (bf16, resident)
    # o_ref  : (TQ, H)  output tile (written on the last KV step)
    # scratch: q (TQ,H) bf16 | m,l (TQ,1) f32 | acc (TQ,H) f32
    TQ = xq_ref.shape[0]
    TK = xkv_ref.shape[0]
    H = wq_ref.shape[-1]

    q_idx = pl.program_id(1)
    kv_idx = pl.program_id(2)
    q_start = q_idx * TQ
    kv_start = kv_idx * TK

    @pl.when(kv_idx == 0)
    def _init():
        m_scr[...] = jnp.full_like(m_scr, _NEG_INF)
        l_scr[...] = jnp.zeros_like(l_scr)
        acc_scr[...] = jnp.zeros_like(acc_scr)
        # Project q once per Q tile and fold in the 1/sqrt(H) scale.
        q = jnp.dot(xq_ref[...], wq_ref[...], preferred_element_type=jnp.float32)
        q_scr[...] = (q * (H ** -0.5)).astype(q_scr.dtype)

    # Causal block skipping: KV tiles entirely above the diagonal do no work.
    @pl.when(kv_start <= q_start + TQ - 1)
    def _compute():
        xkv = xkv_ref[...]
        k = jnp.dot(xkv, wk_ref[...],
                    preferred_element_type=jnp.float32).astype(xkv.dtype)
        v = jnp.dot(xkv, wv_ref[...],
                    preferred_element_type=jnp.float32).astype(xkv.dtype)
        q = q_scr[...]                                   # bf16, already scaled

        # (TQ, H) x (TK, H) contracting on H -> (TQ, TK); no k transpose.
        s = lax.dot_general(q, k, (((1,), (1,)), ((), ())),
                            preferred_element_type=jnp.float32)

        # Per-tile causal mask (only a (TQ, TK) iota, not (T, T)).
        row = q_start + lax.broadcasted_iota(jnp.int32, (TQ, TK), 0)
        col = kv_start + lax.broadcasted_iota(jnp.int32, (TQ, TK), 1)
        s = jnp.where(col <= row, s, _NEG_INF)

        # Online (flash) softmax update.
        m_prev = m_scr[...]
        m_new = jnp.maximum(m_prev, jnp.max(s, axis=-1, keepdims=True))
        alpha = jnp.exp(m_prev - m_new)
        p = jnp.exp(s - m_new)
        l_scr[...] = alpha * l_scr[...] + jnp.sum(p, axis=-1, keepdims=True)
        acc_scr[...] = alpha * acc_scr[...] + jnp.dot(
            p.astype(v.dtype), v, preferred_element_type=jnp.float32)
        m_scr[...] = m_new

    # TODO(synk): dropout on the attention probabilities is identity in eval
    # mode; training-mode dropout would use pltpu.prng_seed + prng_random_bits.

    @pl.when(kv_idx == pl.num_programs(2) - 1)
    def _finalize():
        inv_l = pl.reciprocal(l_scr[...], approx=True)
        o_ref[...] = (acc_scr[...] * inv_l).astype(o_ref.dtype)


def _pick_tile(total, target, align=8):
    """Largest tile <= target that is a multiple of `align` and divides `total`
    (falls back to the full extent)."""
    if total <= target:
        return total
    t = (target // align) * align
    while t >= align:
        if total % t == 0:
            return t
        t -= align
    return total


def head_forward(x, w_key, w_query, w_value, *,
                 q_tile=256, kv_tile=512, compute_dtype=jnp.bfloat16):
    """x: (B, T, C); w_*: (C, H) (pre-transposed nn.Linear weights)."""
    B, T, C = x.shape
    H = w_key.shape[-1]
    out_dtype = x.dtype

    # bf16 operands for the MXU; every matmul accumulates in f32.
    xc = x.astype(compute_dtype)
    wk = w_key.astype(compute_dtype)
    wq = w_query.astype(compute_dtype)
    wv = w_value.astype(compute_dtype)

    TQ = _pick_tile(T, q_tile)
    TK = _pick_tile(T, kv_tile)
    grid = (B, T // TQ, T // TK)

    grid_spec = pltpu.PrefetchScalarGridSpec(
        num_scalar_prefetch=0,
        grid=grid,
        in_specs=[
            # x is passed twice: once sliced by Q tile, once by KV tile.
            pl.BlockSpec((None, TQ, C), lambda b, qi, ki: (b, qi, 0)),
            pl.BlockSpec((None, TK, C), lambda b, qi, ki: (b, ki, 0)),
            pl.BlockSpec((C, H), lambda b, qi, ki: (0, 0)),
            pl.BlockSpec((C, H), lambda b, qi, ki: (0, 0)),
            pl.BlockSpec((C, H), lambda b, qi, ki: (0, 0)),
        ],
        out_specs=pl.BlockSpec((None, TQ, H), lambda b, qi, ki: (b, qi, 0)),
        scratch_shapes=[
            pltpu.VMEM((TQ, H), compute_dtype),   # scaled q for this Q tile
            pltpu.VMEM((TQ, 1), jnp.float32),     # running max m
            pltpu.VMEM((TQ, 1), jnp.float32),     # running sum l
            pltpu.VMEM((TQ, H), jnp.float32),     # output accumulator
        ],
    )

    return pl.pallas_call(
        _head_kernel,
        out_shape=jax.ShapeDtypeStruct((B, T, H), out_dtype),
        grid_spec=grid_spec,
        compiler_params=pltpu.CompilerParams(
            # batch + Q-tile axes shard across TensorCores (v7x); KV is the
            # sequential online-softmax reduction.
            dimension_semantics=("parallel", "parallel", "arbitrary"),
            # safe on 64 MiB (v7x) parts; raises v5e above its 16 MiB default.
            # Raise further on 128 MiB parts if using bigger tiles.
            vmem_limit_bytes=32 * 1024 * 1024,
        ),
    )(xc, xc, wk, wq, wv)


def head_reference(x, w_key, w_query, w_value):
    """Pure-JAX f32 reference mirroring the PyTorch forward (eval mode)."""
    k = x @ w_key
    q = x @ w_query
    v = x @ w_value
    H = k.shape[-1]
    wei = (q @ jnp.swapaxes(k, -2, -1)) * (H ** -0.5)
    T = x.shape[1]
    tril = jnp.tril(jnp.ones((T, T), dtype=bool))
    wei = jnp.where(tril, wei, -jnp.inf)
    wei = jax.nn.softmax(wei, axis=-1)
    return wei @ v


if __name__ == "__main__":
    # Shapes consistent with the module: block_size (T)=8, n_embed (C)=32,
    # n_head=4 -> head_size (H)=8.
    B, T, C, n_head = 2, 8, 32, 4
    H = C // n_head

    key = jax.random.PRNGKey(0)
    kx, kk, kq, kv = jax.random.split(key, 4)

    x = jax.random.normal(kx, (B, T, C), dtype=jnp.float32)

    bound = 1.0 / math.sqrt(C)
    w_key_ = jax.random.uniform(kk, (C, H), jnp.float32, -bound, bound)
    w_query = jax.random.uniform(kq, (C, H), jnp.float32, -bound, bound)
    w_value = jax.random.uniform(kv, (C, H), jnp.float32, -bound, bound)

    out = head_forward(x, w_key_, w_query, w_value)
    out = jax.block_until_ready(out)
    assert out.shape == (B, T, H)
    assert out.dtype == x.dtype

    # Reference in f32 math on the same bf16-rounded inputs the kernel sees,
    # so the comparison only measures in-kernel bf16/approx-recip rounding.
    def rnd(a):
        return a.astype(jnp.bfloat16).astype(jnp.float32)

    ref = head_reference(rnd(x), rnd(w_key_), rnd(w_query), rnd(w_value))
    assert jnp.allclose(out.astype(jnp.float32), ref, atol=2e-2, rtol=2e-2), \
        "mismatch vs reference"

    print("KERNEL_OK")
</pallas_src>

<mosaic_0001>
module attributes {stable_mosaic.version = 11 : i64} {
  func.func @_head_kernel(%arg0: i32, %arg1: i32, %arg2: i32, %arg3: memref<1x8x32xbf16, #tpu.memory_space<vmem>>, %arg4: memref<1x8x32xbf16, #tpu.memory_space<vmem>>, %arg5: memref<32x8xbf16, #tpu.memory_space<vmem>>, %arg6: memref<32x8xbf16, #tpu.memory_space<vmem>>, %arg7: memref<32x8xbf16, #tpu.memory_space<vmem>>, %arg8: memref<1x8x8xf32, #tpu.memory_space<vmem>>, %arg9: memref<8x8xbf16, #tpu.memory_space<vmem>>, %arg10: memref<8x1xf32, #tpu.memory_space<vmem>>, %arg11: memref<8x1xf32, #tpu.memory_space<vmem>>, %arg12: memref<8x8xf32, #tpu.memory_space<vmem>>) attributes {dimension_semantics = [#tpu.dimension_semantics<parallel>, #tpu.dimension_semantics<parallel>, #tpu.dimension_semantics<arbitrary>], iteration_bounds = array<i64: 2, 1, 1>, scalar_prefetch = 0 : i64, scratch_operands = 4 : i64, tpu.core_type = #tpu.core_type<tc>, window_params = [{transform_indices = @transform_0, window_bounds = array<i64: 1, 8, 32>}, {transform_indices = @transform_1, window_bounds = array<i64: 1, 8, 32>}, {pipeline_mode = #tpu.pipeline_mode<synchronous>, transform_indices = @transform_2, window_bounds = array<i64: 32, 8>}, {pipeline_mode = #tpu.pipeline_mode<synchronous>, transform_indices = @transform_3, window_bounds = array<i64: 32, 8>}, {pipeline_mode = #tpu.pipeline_mode<synchronous>, transform_indices = @transform_4, window_bounds = array<i64: 32, 8>}, {transform_indices = @transform_5, window_bounds = array<i64: 1, 8, 8>}]} {
    %c8_i32 = arith.constant 8 : i32
    %0 = arith.muli %arg1, %c8_i32 : i32
    %c8_i32_0 = arith.constant 8 : i32
    %1 = arith.muli %arg2, %c8_i32_0 : i32
    %c0_i32 = arith.constant 0 : i32
    %2 = arith.cmpi eq, %arg2, %c0_i32 : i32
    %3 = arith.extui %2 : i1 to i32
    %c0_i32_1 = arith.constant 0 : i32
    %4 = arith.cmpi ne, %3, %c0_i32_1 : i32
    scf.if %4 {
      %cst = arith.constant -1.000000e+30 : f32
      %13 = vector.broadcast %cst : f32 to vector<8x1xf32>
      %c0 = arith.constant 0 : index
      %c0_6 = arith.constant 0 : index
      %14 = vector.load %arg10[%c0, %c0_6] : memref<8x1xf32, #tpu.memory_space<vmem>>, vector<8x1xf32>
      tpu.vector_store %arg10[%c0, %c0_6], %13 {strides = array<i32>} : memref<8x1xf32, #tpu.memory_space<vmem>>, vector<8x1xf32>,
      %cst_7 = arith.constant 0.000000e+00 : f32
      %15 = vector.broadcast %cst_7 : f32 to vector<8x1xf32>
      %c0_8 = arith.constant 0 : index
      %c0_9 = arith.constant 0 : index
      %16 = vector.load %arg11[%c0_8, %c0_9] : memref<8x1xf32, #tpu.memory_space<vmem>>, vector<8x1xf32>
      tpu.vector_store %arg11[%c0_8, %c0_9], %15 {strides = array<i32>} : memref<8x1xf32, #tpu.memory_space<vmem>>, vector<8x1xf32>,
      %cst_10 = arith.constant 0.000000e+00 : f32
      %17 = vector.broadcast %cst_10 : f32 to vector<8x8xf32>
      %c0_11 = arith.constant 0 : index
      %c0_12 = arith.constant 0 : index
      %18 = vector.load %arg12[%c0_11, %c0_12] : memref<8x8xf32, #tpu.memory_space<vmem>>, vector<8x8xf32>
      tpu.vector_store %arg12[%c0_11, %c0_12], %17 {strides = array<i32>} : memref<8x8xf32, #tpu.memory_space<vmem>>, vector<8x8xf32>,
      %c0_13 = arith.constant 0 : index
      %c0_14 = arith.constant 0 : index
      %c0_15 = arith.constant 0 : index
      %19 = vector.load %arg3[%c0_13, %c0_14, %c0_15] : memref<1x8x32xbf16, #tpu.memory_space<vmem>>, vector<1x8x32xbf16>
      %20 = vector.shape_cast %19 : vector<1x8x32xbf16> to vector<8x32xbf16>
      %c0_16 = arith.constant 0 : index
      %c0_17 = arith.constant 0 : index
      %21 = vector.load %arg6[%c0_16, %c0_17] : memref<32x8xbf16, #tpu.memory_space<vmem>>, vector<32x8xbf16>
      %cst_18 = arith.constant dense<0.000000e+00> : vector<8x8xf32>
      %22 = tpu.matmul %20, %21, %cst_18 {dimension_numbers = #tpu.dot_dimension_numbers<[1], [0], [0], [1], [0, 0, 1, 1], [], []>} : vector<8x32xbf16>, vector<32x8xbf16>, vector<8x8xf32> -> vector<8x8xf32>
      %cst_19 = arith.constant 0.353553385 : f32
      %23 = vector.broadcast %cst_19 : f32 to vector<8x8xf32>
      %24 = arith.mulf %22, %23 : vector<8x8xf32>
      %25 = arith.truncf %24 : vector<8x8xf32> to vector<8x8xbf16>
      %c0_20 = arith.constant 0 : index
      %c0_21 = arith.constant 0 : index
      %26 = vector.load %arg9[%c0_20, %c0_21] : memref<8x8xbf16, #tpu.memory_space<vmem>>, vector<8x8xbf16>
      tpu.vector_store %arg9[%c0_20, %c0_21], %25 {strides = array<i32>} : memref<8x8xbf16, #tpu.memory_space<vmem>>, vector<8x8xbf16>,
    } else {
    }
    %c8_i32_2 = arith.constant 8 : i32
    %5 = arith.addi %0, %c8_i32_2 : i32
    %c1_i32 = arith.constant 1 : i32
    %6 = arith.subi %5, %c1_i32 : i32
    %7 = arith.cmpi sle, %1, %6 : i32
    %8 = arith.extui %7 : i1 to i32
    %c0_i32_3 = arith.constant 0 : i32
    %9 = arith.cmpi ne, %8, %c0_i32_3 : i32
    scf.if %9 {
      %c0 = arith.constant 0 : index
      %c0_6 = arith.constant 0 : index
      %c0_7 = arith.constant 0 : index
      %13 = vector.load %arg4[%c0, %c0_6, %c0_7] : memref<1x8x32xbf16, #tpu.memory_space<vmem>>, vector<1x8x32xbf16>
      %14 = vector.shape_cast %13 : vector<1x8x32xbf16> to vector<8x32xbf16>
      %c0_8 = arith.constant 0 : index
      %c0_9 = arith.constant 0 : index
      %15 = vector.load %arg5[%c0_8, %c0_9] : memref<32x8xbf16, #tpu.memory_space<vmem>>, vector<32x8xbf16>
      %cst = arith.constant dense<0.000000e+00> : vector<8x8xf32>
      %16 = tpu.matmul %14, %15, %cst {dimension_numbers = #tpu.dot_dimension_numbers<[1], [0], [0], [1], [0, 0, 1, 1], [], []>} : vector<8x32xbf16>, vector<32x8xbf16>, vector<8x8xf32> -> vector<8x8xf32>
      %17 = arith.truncf %16 : vector<8x8xf32> to vector<8x8xbf16>
      %c0_10 = arith.constant 0 : index
      %c0_11 = arith.constant 0 : index
      %18 = vector.load %arg7[%c0_10, %c0_11] : memref<32x8xbf16, #tpu.memory_space<vmem>>, vector<32x8xbf16>
      %cst_12 = arith.constant dense<0.000000e+00> : vector<8x8xf32>
      %19 = tpu.matmul %14, %18, %cst_12 {dimension_numbers = #tpu.dot_dimension_numbers<[1], [0], [0], [1], [0, 0, 1, 1], [], []>} : vector<8x32xbf16>, vector<32x8xbf16>, vector<8x8xf32> -> vector<8x8xf32>
      %20 = arith.truncf %19 : vector<8x8xf32> to vector<8x8xbf16>
      %c0_13 = arith.constant 0 : index
      %c0_14 = arith.constant 0 : index
      %21 = vector.load %arg9[%c0_13, %c0_14] : memref<8x8xbf16, #tpu.memory_space<vmem>>, vector<8x8xbf16>
      %cst_15 = arith.constant dense<0.000000e+00> : vector<8x8xf32>
      %22 = tpu.matmul %21, %17, %cst_15 {dimension_numbers = #tpu.dot_dimension_numbers<[1], [1], [0], [0], [0, 0, 1, 0], [], []>} : vector<8x8xbf16>, vector<8x8xbf16>, vector<8x8xf32> -> vector<8x8xf32>
      %23 = tpu.iota {dimensions = array<i32: 0>} : vector<8x8xi32>
      %24 = vector.broadcast %0 : i32 to vector<8x8xi32>
      %25 = arith.addi %24, %23 : vector<8x8xi32>
      %26 = tpu.iota {dimensions = array<i32: 1>} : vector<8x8xi32>
      %27 = vector.broadcast %1 : i32 to vector<8x8xi32>
      %28 = arith.addi %27, %26 : vector<8x8xi32>
      %29 = arith.cmpi sle, %28, %25 : vector<8x8xi32>
      %cst_16 = arith.constant -1.000000e+30 : f32
      %30 = vector.broadcast %cst_16 : f32 to vector<8x8xf32>
      %31 = arith.select %29, %22, %30 : vector<8x8xi1>, vector<8x8xf32>
      %c0_17 = arith.constant 0 : index
      %c0_18 = arith.constant 0 : index
      %32 = vector.load %arg10[%c0_17, %c0_18] : memref<8x1xf32, #tpu.memory_space<vmem>>, vector<8x1xf32>
      %cst_19 = arith.constant dense<0xFF800000> : vector<8xf32>
      %33 = vector.multi_reduction <maximumf>, %31, %cst_19 [1] : vector<8x8xf32> to vector<8xf32>
      %34 = vector.shape_cast %33 : vector<8xf32> to vector<8x1xf32>
      %35 = arith.maximumf %32, %34 : vector<8x1xf32>
      %36 = arith.subf %32, %35 : vector<8x1xf32>
      %37 = math.exp %36 : vector<8x1xf32>
      %38 = vector.broadcast %35 : vector<8x1xf32> to vector<8x8xf32>
      %39 = arith.subf %31, %38 : vector<8x8xf32>
      %40 = math.exp %39 : vector<8x8xf32>
      %c0_20 = arith.constant 0 : index
      %c0_21 = arith.constant 0 : index
      %41 = vector.load %arg11[%c0_20, %c0_21] : memref<8x1xf32, #tpu.memory_space<vmem>>, vector<8x1xf32>
      %42 = arith.mulf %37, %41 : vector<8x1xf32>
      %cst_22 = arith.constant dense<0.000000e+00> : vector<8xf32>
      %43 = vector.multi_reduction <add>, %40, %cst_22 [1] : vector<8x8xf32> to vector<8xf32>
      %44 = vector.shape_cast %43 : vector<8xf32> to vector<8x1xf32>
      %45 = arith.addf %42, %44 : vector<8x1xf32>
      %c0_23 = arith.constant 0 : index
      %c0_24 = arith.constant 0 : index
      %46 = vector.load %arg11[%c0_23, %c0_24] : memref<8x1xf32, #tpu.memory_space<vmem>>, vector<8x1xf32>
      tpu.vector_store %arg11[%c0_23, %c0_24], %45 {strides = array<i32>} : memref<8x1xf32, #tpu.memory_space<vmem>>, vector<8x1xf32>,
      %c0_25 = arith.constant 0 : index
      %c0_26 = arith.constant 0 : index
      %47 = vector.load %arg12[%c0_25, %c0_26] : memref<8x8xf32, #tpu.memory_space<vmem>>, vector<8x8xf32>
      %48 = vector.broadcast %37 : vector<8x1xf32> to vector<8x8xf32>
      %49 = arith.mulf %48, %47 : vector<8x8xf32>
      %50 = arith.truncf %40 : vector<8x8xf32> to vector<8x8xbf16>
      %cst_27 = arith.constant dense<0.000000e+00> : vector<8x8xf32>
      %51 = tpu.matmul %50, %20, %cst_27 {dimension_numbers = #tpu.dot_dimension_numbers<[1], [0], [0], [1], [0, 0, 1, 1], [], []>} : vector<8x8xbf16>, vector<8x8xbf16>, vector<8x8xf32> -> vector<8x8xf32>
      %52 = arith.addf %49, %51 : vector<8x8xf32>
      %c0_28 = arith.constant 0 : index
      %c0_29 = arith.constant 0 : index
      %53 = vector.load %arg12[%c0_28, %c0_29] : memref<8x8xf32, #tpu.memory_space<vmem>>, vector<8x8xf32>
      tpu.vector_store %arg12[%c0_28, %c0_29], %52 {strides = array<i32>} : memref<8x8xf32, #tpu.memory_space<vmem>>, vector<8x8xf32>,
      %c0_30 = arith.constant 0 : index
      %c0_31 = arith.constant 0 : index
      %54 = vector.load %arg10[%c0_30, %c0_31] : memref<8x1xf32, #tpu.memory_space<vmem>>, vector<8x1xf32>
      tpu.vector_store %arg10[%c0_30, %c0_31], %35 {strides = array<i32>} : memref<8x1xf32, #tpu.memory_space<vmem>>, vector<8x1xf32>,
    } else {
    }
    %c0_i32_4 = arith.constant 0 : i32
    %10 = arith.cmpi eq, %arg2, %c0_i32_4 : i32
    %11 = arith.extui %10 : i1 to i32
    %c0_i32_5 = arith.constant 0 : i32
    %12 = arith.cmpi ne, %11, %c0_i32_5 : i32
    scf.if %12 {
      %c0 = arith.constant 0 : index
      %c0_6 = arith.constant 0 : index
      %13 = vector.load %arg11[%c0, %c0_6] : memref<8x1xf32, #tpu.memory_space<vmem>>, vector<8x1xf32>
      %14 = tpu.reciprocal %13 {approx = true} : vector<8x1xf32> -> vector<8x1xf32>
      %c0_7 = arith.constant 0 : index
      %c0_8 = arith.constant 0 : index
      %15 = vector.load %arg12[%c0_7, %c0_8] : memref<8x8xf32, #tpu.memory_space<vmem>>, vector<8x8xf32>
      %16 = vector.broadcast %14 : vector<8x1xf32> to vector<8x8xf32>
      %17 = arith.mulf %15, %16 : vector<8x8xf32>
      %c0_9 = arith.constant 0 : index
      %c0_10 = arith.constant 0 : index
      %c0_11 = arith.constant 0 : index
      %18 = vector.load %arg8[%c0_9, %c0_10, %c0_11] : memref<1x8x8xf32, #tpu.memory_space<vmem>>, vector<1x8x8xf32>
      %19 = vector.shape_cast %18 : vector<1x8x8xf32> to vector<8x8xf32>
      %20 = vector.shape_cast %17 : vector<8x8xf32> to vector<1x8x8xf32>
      tpu.vector_store %arg8[%c0_9, %c0_10, %c0_11], %20 {strides = array<i32>} : memref<1x8x8xf32, #tpu.memory_space<vmem>>, vector<1x8x8xf32>,
    } else {
    }
    return
  }
  func.func @transform_0(%arg0: i32, %arg1: i32, %arg2: i32) -> (i32, i32, i32) {
    %c0_i32 = arith.constant 0 : i32
    %c0_i32_0 = arith.constant 0 : i32
    return %arg0, %arg1, %c0_i32 : i32, i32, i32
  }
  func.func @transform_1(%arg0: i32, %arg1: i32, %arg2: i32) -> (i32, i32, i32) {
    %c0_i32 = arith.constant 0 : i32
    %c0_i32_0 = arith.constant 0 : i32
    return %arg0, %arg2, %c0_i32 : i32, i32, i32
  }
  func.func @transform_2(%arg0: i32, %arg1: i32, %arg2: i32) -> (i32, i32) {
    %c0_i32 = arith.constant 0 : i32
    %c0_i32_0 = arith.constant 0 : i32
    %c0_i32_1 = arith.constant 0 : i32
    return %c0_i32, %c0_i32_0 : i32, i32
  }
  func.func @transform_3(%arg0: i32, %arg1: i32, %arg2: i32) -> (i32, i32) {
    %c0_i32 = arith.constant 0 : i32
    %c0_i32_0 = arith.constant 0 : i32
    %c0_i32_1 = arith.constant 0 : i32
    return %c0_i32, %c0_i32_0 : i32, i32
  }
  func.func @transform_4(%arg0: i32, %arg1: i32, %arg2: i32) -> (i32, i32) {
    %c0_i32 = arith.constant 0 : i32
    %c0_i32_0 = arith.constant 0 : i32
    %c0_i32_1 = arith.constant 0 : i32
    return %c0_i32, %c0_i32_0 : i32, i32
  }
  func.func @transform_5(%arg0: i32, %arg1: i32, %arg2: i32) -> (i32, i32, i32) {
    %c0_i32 = arith.constant 0 : i32
    %c0_i32_0 = arith.constant 0 : i32
    return %arg0, %arg1, %c0_i32 : i32, i32, i32
  }
}

</mosaic_0001>

<llo_original>
// kernel: tpu_custom_call.1
$region0: #{tpu_custom_call.1}
  #allocation0 [shape = 'u32[]', space=smem, size = 0x4, offset = 0x4, fixed_abs, tag = 'smem constant byte address 0x4 - core index']
  #allocation1 [shape = 'u32[144,128]{1,0:T(1,128)}', space=vmem, size = 0x12000, scoped, tag = 'internal scratch']
  #allocation2 [shape = 'bf16[8,8]{1,0:T(8,128)(2,1)}', space=vmem, size = 0x800, scoped, tag = 'scratch operand']
  #allocation3 [shape = 'f32[8,1]{1,0:T(8,128)}', space=vmem, size = 0x1000, scoped, tag = 'scratch operand']
  #allocation4 [shape = 'f32[8,1]{1,0:T(8,128)}', space=vmem, size = 0x1000, scoped, tag = 'scratch operand']
  #allocation5 [shape = 'f32[8,8]{1,0:T(8,128)}', space=vmem, size = 0x1000, scoped, tag = 'scratch operand']
  %s0 = inlined_call_operand.vmem [shape: bf16[2,8,32], index: 0, kind: input, shape index: {}]
  %s1 = inlined_call_operand.vmem [shape: bf16[2,8,32], index: 1, kind: input, shape index: {}]
  %s2 = inlined_call_operand.vmem [shape: bf16[32,8], index: 2, kind: input, shape index: {}]
  %s3 = inlined_call_operand.vmem [shape: bf16[32,8], index: 3, kind: input, shape index: {}]
  %s4 = inlined_call_operand.vmem [shape: bf16[32,8], index: 4, kind: input, shape index: {}]
  %s5 = inlined_call_operand.hbm [shape: f32[2,8,8], index: 5, kind: output, shape index: {}]
  %s6 = sld [smem:[#allocation0]]
  $region65: #{tpu_custom_call.1} parent=0
    _
  %s8 = ssub.s32 1, %s6
  %s9 = scalar_select 0, %s8, %s6
  $region1: #{tpu_custom_call.1} parent=0
    #allocation6 [shape = 'u8[8192]{0}', space=vmem, size = 0x2000, scoped, tag = 'output window, operand 0']
    #allocation7 [shape = 's32[2]{0}', space=sflag, size = 0x8, scoped, tag = 'scoped memory for tpu_custom_call.1']
    %10 = vsyncpa [#allocation7], 0
    %s11 = scalar_lea.sflag [#allocation7], 1
    %12 = vsyncpa %s11, 0
    loop: start=0, step=1, limit=4
    $region2: #{tpu_custom_call.1} parent=1 // loop_pre_header
      _
    $region3: #{tpu_custom_call.1} parent=1 // loop_header
      %s14 = sphi 0, %s18
      %p15 = scmp.ge.s32.totalorder %s14, 4
      %s21 = sphi 0, %s40
      %s22 = sphi 0, %s36
      %s23 = sphi 0, %s32
      %s24 = sphi 0, %s21
      %s25 = sphi 0, %s22
      %s26 = sphi 0, %s23
      %s27 = sphi 0, %s24
      %s28 = sphi 0, %s25
      %s29 = sphi 0, %s26
      %s45 = sphi 0, %s47
      %s48 = sphi 0, %s45
      %s49 = sphi 0, %s48
      %s65 = sphi 0, %s49
      %s73 = sphi 0, %s75
      %s76 = sphi 0, %s73
      %s77 = sphi 0, %s76
      %s93 = sphi 0, %s77
      %s97 = sphi 0, %s97
      %s99 = sphi 0, %s97
      %s100 = sphi 0, %s99
      %s114 = sphi 0, %s100
      %s118 = sphi 0, %s118
      %s120 = sphi 0, %s118
      %s121 = sphi 0, %s120
      %s135 = sphi 0, %s121
      %s139 = sphi 0, %s139
      %s141 = sphi 0, %s139
      %s142 = sphi 0, %s141
      %s156 = sphi 0, %s142
      %s164 = sphi 0, %s166
      %s167 = sphi 0, %s164
      %s168 = sphi 0, %s167
      %s184 = sphi 0, %s168
    $region4: #{tpu_custom_call.1} parent=1 // loop_header_branch
      %17 = sbr.rel (%p15) target = $region8
    $region5: #{tpu_custom_call.1} parent=1 // loop_body
      %s19 = ssub.s32 %s14, 1
      %s20 = ssub.s32 %s14, 2
      %s30 = sadd.s32 1, %s23
      %p31 = scmp.ge.s32.totalorder %s30, 1
      %s32 = scalar_select %p31, 0, %s30
      %s33 = sadd.s32 1, %s22
      %s34 = scalar_select %p31, %s33, %s22
      %p35 = scmp.ge.s32.totalorder %s34, 1
      %s36 = scalar_select %p35, 0, %s34
      %s37 = sadd.s32 1, %s21
      %s38 = scalar_select %p35, %s37, %s21
      %p39 = scmp.ge.s32.totalorder %s38, 2
      %s40 = scalar_select %p39, 0, %s38
      %s41 = ssub.s32 %s21, %s40
      %s42 = ssub.s32 %s22, %s36
      %s43 = sor.u32 %s41, %s42
      %p44 = scmp.eq.s32.totalorder %s43, 0
      %s46 = sadd.s32 %s45, 1
      %s47 = scalar_select %p44, %s45, %s46
      %p50 = pneg %p44
      %p51 = scmp.eq.s32.totalorder %s14, 1
      %p52 = por %p50, %p51
      %p53 = scmp.ne.s32.totalorder %s45, %s48
      %p54 = scmp.eq.s32.totalorder %s14, 0
      %p55 = por %p53, %p54
      %p56 = scmp.ne.s32.totalorder %s45, %s48
      %p57 = scmp.eq.s32.totalorder %s19, 1
      %p58 = por %p56, %p57
      %p59 = scmp.ne.s32.totalorder %s48, %s49
      %p60 = scmp.eq.s32.totalorder %s19, 0
      %p61 = por %p59, %p60
      %p62 = scmp.ne.s32.totalorder %s48, %s49
      %p63 = scmp.eq.s32.totalorder %s20, 1
      %p64 = por %p62, %p63
      %p66 = scmp.ne.s32.totalorder %s49, %s65
      %p67 = scmp.eq.s32.totalorder %s20, 0
      %p68 = por %p66, %p67
      %s69 = ssub.s32 %s21, %s40
      %s70 = ssub.s32 %s23, %s32
      %s71 = sor.u32 %s69, %s70
      %p72 = scmp.eq.s32.totalorder %s71, 0
      %s74 = sadd.s32 %s73, 1
      %s75 = scalar_select %p72, %s73, %s74
      %p78 = pneg %p72
      %p79 = scmp.eq.s32.totalorder %s14, 1
      %p80 = por %p78, %p79
      %p81 = scmp.ne.s32.totalorder %s73, %s76
      %p82 = scmp.eq.s32.totalorder %s14, 0
      %p83 = por %p81, %p82
      %p84 = scmp.ne.s32.totalorder %s73, %s76
      %p85 = scmp.eq.s32.totalorder %s19, 1
      %p86 = por %p84, %p85
      %p87 = scmp.ne.s32.totalorder %s76, %s77
      %p88 = scmp.eq.s32.totalorder %s19, 0
      %p89 = por %p87, %p88
      %p90 = scmp.ne.s32.totalorder %s76, %s77
      %p91 = scmp.eq.s32.totalorder %s20, 1
      %p92 = por %p90, %p91
      %p94 = scmp.ne.s32.totalorder %s77, %s93
      %p95 = scmp.eq.s32.totalorder %s20, 0
      %p96 = por %p94, %p95
      %s98 = sadd.s32 %s97, 1
      %p101 = scmp.eq.s32.totalorder %s14, 1
      %p102 = scmp.ne.s32.totalorder %s97, %s99
      %p103 = scmp.eq.s32.totalorder %s14, 0
      %p104 = por %p102, %p103
      %p105 = scmp.ne.s32.totalorder %s97, %s99
      %p106 = scmp.eq.s32.totalorder %s19, 1
      %p107 = por %p105, %p106
      %p108 = scmp.ne.s32.totalorder %s99, %s100
      %p109 = scmp.eq.s32.totalorder %s19, 0
      %p110 = por %p108, %p109
      %p111 = scmp.ne.s32.totalorder %s99, %s100
      %p112 = scmp.eq.s32.totalorder %s20, 1
      %p113 = por %p111, %p112
      %p115 = scmp.ne.s32.totalorder %s100, %s114
      %p116 = scmp.eq.s32.totalorder %s20, 0
      %p117 = por %p115, %p116
      %s119 = sadd.s32 %s118, 1
      %p122 = scmp.eq.s32.totalorder %s14, 1
      %p123 = scmp.ne.s32.totalorder %s118, %s120
      %p124 = scmp.eq.s32.totalorder %s14, 0
      %p125 = por %p123, %p124
      %p126 = scmp.ne.s32.totalorder %s118, %s120
      %p127 = scmp.eq.s32.totalorder %s19, 1
      %p128 = por %p126, %p127
      %p129 = scmp.ne.s32.totalorder %s120, %s121
      %p130 = scmp.eq.s32.totalorder %s19, 0
      %p131 = por %p129, %p130
      %p132 = scmp.ne.s32.totalorder %s120, %s121
      %p133 = scmp.eq.s32.totalorder %s20, 1
      %p134 = por %p132, %p133
      %p136 = scmp.ne.s32.totalorder %s121, %s135
      %p137 = scmp.eq.s32.totalorder %s20, 0
      %p138 = por %p136, %p137
      %s140 = sadd.s32 %s139, 1
      %p143 = scmp.eq.s32.totalorder %s14, 1
      %p144 = scmp.ne.s32.totalorder %s139, %s141
      %p145 = scmp.eq.s32.totalorder %s14, 0
      %p146 = por %p144, %p145
      %p147 = scmp.ne.s32.totalorder %s139, %s141
      %p148 = scmp.eq.s32.totalorder %s19, 1
      %p149 = por %p147, %p148
      %p150 = scmp.ne.s32.totalorder %s141, %s142
      %p151 = scmp.eq.s32.totalorder %s19, 0
      %p152 = por %p150, %p151
      %p153 = scmp.ne.s32.totalorder %s141, %s142
      %p154 = scmp.eq.s32.totalorder %s20, 1
      %p155 = por %p153, %p154
      %p157 = scmp.ne.s32.totalorder %s142, %s156
      %p158 = scmp.eq.s32.totalorder %s20, 0
      %p159 = por %p157, %p158
      %s160 = ssub.s32 %s21, %s40
      %s161 = ssub.s32 %s22, %s36
      %s162 = sor.u32 %s160, %s161
      %p163 = scmp.eq.s32.totalorder %s162, 0
      %s165 = sadd.s32 %s164, 1
      %s166 = scalar_select %p163, %s164, %s165
      %p169 = pneg %p163
      %p170 = scmp.eq.s32.totalorder %s14, 1
      %p171 = por %p169, %p170
      %p172 = scmp.ne.s32.totalorder %s164, %s167
      %p173 = scmp.eq.s32.totalorder %s14, 0
      %p174 = por %p172, %p173
      %p175 = scmp.ne.s32.totalorder %s164, %s167
      %p176 = scmp.eq.s32.totalorder %s19, 1
      %p177 = por %p175, %p176
      %p178 = scmp.ne.s32.totalorder %s167, %s168
      %p179 = scmp.eq.s32.totalorder %s19, 0
      %p180 = por %p178, %p179
      %p181 = scmp.ne.s32.totalorder %s167, %s168
      %p182 = scmp.eq.s32.totalorder %s20, 1
      %p183 = por %p181, %p182
      %p185 = scmp.ne.s32.totalorder %s168, %s184
      %p186 = scmp.eq.s32.totalorder %s20, 0
      %p187 = por %p185, %p186
      %p188 = scmp.le.s32.totalorder 1, %s14
      %p189 = scmp.lt.s32.totalorder %s14, 3
      %p190 = pnand %p188, %p189
      %p191 = pneg %p190
      // Predicated region
      $region9: #{tpu_custom_call.1} parent=5 // pred_check
        _
      $region10: #{tpu_custom_call.1} parent=5 // pred_check_branch
        %193 = sbr.rel (%p190) target = $region12
      $region11: #{tpu_custom_call.1} parent=5 // pred_region
        %s194 = ssub.s32 %s14, 1
        // Predicated region
        $region13: #{tpu_custom_call.1} parent=11 // pred_check
          %p195 = pneg %p110
        $region14: #{tpu_custom_call.1} parent=11 // pred_check_branch
          %197 = sbr.rel (%p195) target = $region16
        $region15: #{tpu_custom_call.1} parent=11 // pred_region
          _
        $region16: #{tpu_custom_call.1} parent=11 // pred_fallthru
          _
        // Predicated region
        $region17: #{tpu_custom_call.1} parent=11 // pred_check
          %p198 = pneg %p131
        $region18: #{tpu_custom_call.1} parent=11 // pred_check_branch
          %200 = sbr.rel (%p198) target = $region20
        $region19: #{tpu_custom_call.1} parent=11 // pred_region
          _
        $region20: #{tpu_custom_call.1} parent=11 // pred_fallthru
          _
        // Predicated region
        $region21: #{tpu_custom_call.1} parent=11 // pred_check
          %p201 = pneg %p152
        $region22: #{tpu_custom_call.1} parent=11 // pred_check_branch
          %203 = sbr.rel (%p201) target = $region24
        $region23: #{tpu_custom_call.1} parent=11 // pred_region
          _
        $region24: #{tpu_custom_call.1} parent=11 // pred_fallthru
          _
      $region12: #{tpu_custom_call.1} parent=5 // pred_fallthru
        _
      %p204 = scmp.lt.s32.totalorder %s14, 2
      // Predicated region
      $region25: #{tpu_custom_call.1} parent=5 // pred_check
        %p205 = pneg %p204
      $region26: #{tpu_custom_call.1} parent=5 // pred_check_branch
        %207 = sbr.rel (%p205) target = $region28
      $region27: #{tpu_custom_call.1} parent=5 // pred_region
        // Predicated region
        $region29: #{tpu_custom_call.1} parent=27 // pred_check
          %p208 = pneg %p55
        $region30: #{tpu_custom_call.1} parent=27 // pred_check_branch
          %210 = sbr.rel (%p208) target = $region32
        $region31: #{tpu_custom_call.1} parent=27 // pred_region
          %p211 = scmp.lt.s32.totalorder %s21, 1
          %s212 = scalar_select %p211, %s21, 1
          %p213 = scmp.lt.s32.totalorder %s22, 0
          %s214 = scalar_select %p213, %s22, 0
          %s215 = sadd.s32 %s214, %s212
          %s216 = smul.addr %s215, 4
          %s217 = scalar_lea.vmem %s0, %s216
        $region32: #{tpu_custom_call.1} parent=27 // pred_fallthru
          _
        // Predicated region
        $region33: #{tpu_custom_call.1} parent=27 // pred_check
          %p218 = pneg %p83
        $region34: #{tpu_custom_call.1} parent=27 // pred_check_branch
          %220 = sbr.rel (%p218) target = $region36
        $region35: #{tpu_custom_call.1} parent=27 // pred_region
          %p221 = scmp.lt.s32.totalorder %s21, 1
          %s222 = scalar_select %p221, %s21, 1
          %p223 = scmp.lt.s32.totalorder %s23, 0
          %s224 = scalar_select %p223, %s23, 0
          %s225 = sadd.s32 %s224, %s222
          %s226 = smul.addr %s225, 4
          %s227 = scalar_lea.vmem %s1, %s226
        $region36: #{tpu_custom_call.1} parent=27 // pred_fallthru
          _
      $region28: #{tpu_custom_call.1} parent=5 // pred_fallthru
        _
      %p228 = scmp.le.s32.totalorder 1, %s14
      %p229 = scmp.lt.s32.totalorder %s14, 3
      %p230 = pnand %p228, %p229
      %p231 = pneg %p230
      // Predicated region
      $region37: #{tpu_custom_call.1} parent=5 // pred_check
        _
      $region38: #{tpu_custom_call.1} parent=5 // pred_check_branch
        %233 = sbr.rel (%p230) target = $region40
      $region39: #{tpu_custom_call.1} parent=5 // pred_region
        %s234 = ssub.s32 %s14, 1
        %p235 = scmp.lt.s32.totalorder %s24, 1
        %s236 = scalar_select %p235, %s24, 1
        %p237 = scmp.lt.s32.totalorder %s25, 0
        %s238 = scalar_select %p237, %s25, 0
        %s239 = sadd.s32 %s238, %s236
        %s240 = smul.addr %s239, 4
        %s241 = scalar_lea.vmem %s0, %s240
        %p242 = pneg %p61
        %p243 = pneg %p58
        %p244 = scmp.lt.s32.totalorder %s24, 1
        %s245 = scalar_select %p244, %s24, 1
        %p246 = scmp.lt.s32.totalorder %s26, 0
        %s247 = scalar_select %p246, %s26, 0
        %s248 = sadd.s32 %s247, %s245
        %s249 = smul.addr %s248, 4
        %s250 = scalar_lea.vmem %s1, %s249
        %p251 = pneg %p89
        %p252 = pneg %p86
        %p253 = pneg %p110
        %p254 = pneg %p107
        %p255 = pneg %p131
        %p256 = pneg %p128
        %p257 = pneg %p152
        %p258 = pneg %p149
        %p259 = pneg %p180
        %p260 = pneg %p177
        %s261 = sand.u32 %s167, 1
        %s262 = scalar_lea.sflag [#allocation7], %s261
        %s263 = sand.u32 %s167, 1
        %s264 = smul.addr %s263, 8
        %s265 = scalar_lea.vmem [#allocation6], %s264
        %p266 = scmp.lt.s32.totalorder %s24, 1
        %s267 = scalar_select %p266, %s24, 1
        %p268 = scmp.lt.s32.totalorder %s25, 0
        %s269 = scalar_select %p268, %s25, 0
        %s270 = sadd.s32 %s269, %s267
        %s271 = smul.addr %s270, 4
        %s272 = scalar_lea.vmem %s0, %s271
        %p273 = scmp.lt.s32.totalorder %s24, 1
        %s274 = scalar_select %p273, %s24, 1
        %p275 = scmp.lt.s32.totalorder %s26, 0
        %s276 = scalar_select %p275, %s26, 0
        %s277 = sadd.s32 %s276, %s274
        %s278 = smul.addr %s277, 4
        %s279 = scalar_lea.vmem %s1, %s278
        %s281 = smul.u32 %s25, 8
        %s282 = smul.u32 %s26, 8
        %p283 = scmp.eq.s32.totalorder %s26, 0
        // Predicated region
        $region41: #{tpu_custom_call.1} parent=39 // pred_check
          %p284 = pneg %p283
        $region42: #{tpu_custom_call.1} parent=39 // pred_check_branch
          %286 = sbr.rel (%p284) target = $region44
        $region43: #{tpu_custom_call.1} parent=39 // pred_region
          %vm287 = vcmask 7168
          %288 = vst.msk [vmem:[#allocation3] sm:$0xff] %vm287, -1e+30
          %289 = vst.msk [vmem:[#allocation4] sm:$0xff] %vm287, 0.0
          %vm290 = vcmask 64512
          %291 = vst.msk [vmem:[#allocation5] sm:$0xff] %vm290, 0.0
          %v292 = vld [vmem:[%s272] sm:$0xf]
          %v293 = vld [vmem:[%s3] sm:$0xf]
          %v294 = vld [vmem:[%s3 + $0x4] sm:$0xf]
          %v295 = vld [vmem:[%s3 + $0x8] sm:$0xf]
          %v296 = vld [vmem:[%s3 + $0xc] sm:$0xf]
          %v301 = vunpack.c.l.b16 %v293
          %v302 = vunpack.c.l.b16 %v294
          %v303 = vunpack.c.l.b16 %v295
          %v304 = vunpack.c.l.b16 %v296
          %v305 = vpack.c.b16 %v302, %v301
          %v306 = vpack.c.b16 %v304, %v303
          %vm309 = vcmask 261120
          %v311 = vsel %vm309, %v292, 0
          %313 = vmatprep.subr.bf16.mxu0 0
          %314 = vmatpush1.bf16.msra.mxu0 0
          %315 = vmatprep.subr.bf16.mxu0 0
          %316 = vmatpush1.bf16.msra.mxu0 0
          %317 = vmatprep.subr.bf16.mxu0 0
          %318 = vmatpush1.bf16.msra.mxu0 0
          %319 = vmatprep.subr.bf16.mxu0 0
          %320 = vmatpush1.bf16.msra.mxu0 0
          %321 = vmatprep.subr.bf16.mxu0 0
          %322 = vmatpush1.bf16.msra.mxu0 0
          %323 = vmatprep.subr.bf16.mxu0 0
          %324 = vmatpush1.bf16.msra.mxu0 0
          %325 = vmatprep.subr.bf16.mxu0 0
          %326 = vmatpush1.bf16.msra.mxu0 %v306
          %327 = vmatprep.subr.bf16.mxu0 0
          %328 = vmatpush1.bf16.msra.mxu0 %v305
          %329 = vmatprep.subr.bf16.mxu0 0
          %330 = vmatpush2.bf16.msra.mxu0 0
          %331 = vmatprep.subr.bf16.mxu0 0
          %332 = vmatpush2.bf16.msra.mxu0 0
          %333 = vmatprep.subr.bf16.mxu0 0
          %334 = vmatpush2.bf16.msra.mxu0 0
          %335 = vmatprep.subr.bf16.mxu0 0
          %336 = vmatpush2.bf16.msra.mxu0 0
          %337 = vmatprep.subr.bf16.mxu0 0
          %338 = vmatpush2.bf16.msra.mxu0 0
          %339 = vmatprep.subr.bf16.mxu0 0
          %340 = vmatpush2.bf16.msra.mxu0 0
          %341 = vmatprep.subr.bf16.mxu0 0
          %342 = vmatpush2.bf16.msra.mxu0 0
          %343 = vmatprep.subr.bf16.mxu0 0
          %344 = vmatpush2.bf16.msra.mxu0 0
          %345 = vmatprep.mubr.bf16.mxu0 0
          %346 = vmatmul.mubr.bf16.gmra.mxu0 %v311
          %v347 = vpop.f32.mrf.mxu0
          %v348 = vadd.f32 0.0, %v347
          %v349 = vpop.f32.mrf.mxu0
          %v350 = vpop.f32.mrf.mxu0
          %v351 = vpop.f32.mrf.mxu0
          %352 = vdwg.mxu0
          %v353 = vmul.f32 %v348, 0.35355338
          %v354 = vpack.c.bf16 %v353, %v353
          %vm355 = vcmask 60416
          %356 = vst.msk [vmem:[#allocation2] sm:$0xf] %vm355, %v354
        $region44: #{tpu_custom_call.1} parent=39 // pred_fallthru
          _
        %s357 = sadd.s32 %s281, 7
        %p358 = scmp.le.s32.totalorder %s282, %s357
        // Predicated region
        $region45: #{tpu_custom_call.1} parent=39 // pred_check
          %p359 = pneg %p358
        $region46: #{tpu_custom_call.1} parent=39 // pred_check_branch
          %361 = sbr.rel (%p359) target = $region48
        $region47: #{tpu_custom_call.1} parent=39 // pred_region
          %v362 = vld [vmem:[%s279] sm:$0xf]
          %v363 = vld [vmem:[%s2] sm:$0xf]
          %v364 = vld [vmem:[%s2 + $0x4] sm:$0xf]
          %v365 = vld [vmem:[%s2 + $0x8] sm:$0xf]
          %v366 = vld [vmem:[%s2 + $0xc] sm:$0xf]
          %v371 = vunpack.c.l.b16 %v363
          %v372 = vunpack.c.l.b16 %v364
          %v373 = vunpack.c.l.b16 %v365
          %v374 = vunpack.c.l.b16 %v366
          %v375 = vpack.c.b16 %v372, %v371
          %v376 = vpack.c.b16 %v374, %v373
          %vm379 = vcmask 261120
          %v381 = vsel %vm379, %v362, 0
          %383 = vmatprep.subr.bf16.mxu0 0
          %384 = vmatpush1.bf16.msra.mxu0 0
          %385 = vmatprep.subr.bf16.mxu0 0
          %386 = vmatpush1.bf16.msra.mxu0 0
          %387 = vmatprep.subr.bf16.mxu0 0
          %388 = vmatpush1.bf16.msra.mxu0 0
          %389 = vmatprep.subr.bf16.mxu0 0
          %390 = vmatpush1.bf16.msra.mxu0 0
          %391 = vmatprep.subr.bf16.mxu0 0
          %392 = vmatpush1.bf16.msra.mxu0 0
          %393 = vmatprep.subr.bf16.mxu0 0
          %394 = vmatpush1.bf16.msra.mxu0 0
          %395 = vmatprep.subr.bf16.mxu0 0
          %396 = vmatpush1.bf16.msra.mxu0 %v376
          %397 = vmatprep.subr.bf16.mxu0 0
          %398 = vmatpush1.bf16.msra.mxu0 %v375
          %399 = vmatprep.subr.bf16.mxu0 0
          %400 = vmatpush2.bf16.msra.mxu0 0
          %401 = vmatprep.subr.bf16.mxu0 0
          %402 = vmatpush2.bf16.msra.mxu0 0
          %403 = vmatprep.subr.bf16.mxu0 0
          %404 = vmatpush2.bf16.msra.mxu0 0
          %405 = vmatprep.subr.bf16.mxu0 0
          %406 = vmatpush2.bf16.msra.mxu0 0
          %407 = vmatprep.subr.bf16.mxu0 0
          %408 = vmatpush2.bf16.msra.mxu0 0
          %409 = vmatprep.subr.bf16.mxu0 0
          %410 = vmatpush2.bf16.msra.mxu0 0
          %411 = vmatprep.subr.bf16.mxu0 0
          %412 = vmatpush2.bf16.msra.mxu0 0
          %413 = vmatprep.subr.bf16.mxu0 0
          %414 = vmatpush2.bf16.msra.mxu0 0
          %415 = vmatprep.mubr.bf16.mxu0 0
          %416 = vmatmul.mubr.bf16.gmra.mxu0 %v381
          %v417 = vpop.f32.mrf.mxu0
          %v418 = vadd.f32 0.0, %v417
          %v419 = vpop.f32.mrf.mxu0
          %v420 = vpop.f32.mrf.mxu0
          %v421 = vpop.f32.mrf.mxu0
          %422 = vdwg.mxu0
          %v423 = vpack.c.bf16 %v418, %v418
          %v424 = vld [vmem:[%s4] sm:$0xf]
          %v425 = vld [vmem:[%s4 + $0x4] sm:$0xf]
          %v426 = vld [vmem:[%s4 + $0x8] sm:$0xf]
          %v427 = vld [vmem:[%s4 + $0xc] sm:$0xf]
          %v432 = vunpack.c.l.b16 %v424
          %v433 = vunpack.c.l.b16 %v425
          %v434 = vunpack.c.l.b16 %v426
          %v435 = vunpack.c.l.b16 %v427
          %v436 = vpack.c.b16 %v433, %v432
          %v437 = vpack.c.b16 %v435, %v434
          %440 = vmatprep.subr.bf16.mxu0 0
          %441 = vmatpush1.bf16.msra.mxu0 0
          %442 = vmatprep.subr.bf16.mxu0 0
          %443 = vmatpush1.bf16.msra.mxu0 0
          %444 = vmatprep.subr.bf16.mxu0 0
          %445 = vmatpush1.bf16.msra.mxu0 0
          %446 = vmatprep.subr.bf16.mxu0 0
          %447 = vmatpush1.bf16.msra.mxu0 0
          %448 = vmatprep.subr.bf16.mxu0 0
          %449 = vmatpush1.bf16.msra.mxu0 0
          %450 = vmatprep.subr.bf16.mxu0 0
          %451 = vmatpush1.bf16.msra.mxu0 0
          %452 = vmatprep.subr.bf16.mxu0 0
          %453 = vmatpush1.bf16.msra.mxu0 %v437
          %454 = vmatprep.subr.bf16.mxu0 0
          %455 = vmatpush1.bf16.msra.mxu0 %v436
          %456 = vmatprep.subr.bf16.mxu0 0
          %457 = vmatpush2.bf16.msra.mxu0 0
          %458 = vmatprep.subr.bf16.mxu0 0
          %459 = vmatpush2.bf16.msra.mxu0 0
          %460 = vmatprep.subr.bf16.mxu0 0
          %461 = vmatpush2.bf16.msra.mxu0 0
          %462 = vmatprep.subr.bf16.mxu0 0
          %463 = vmatpush2.bf16.msra.mxu0 0
          %464 = vmatprep.subr.bf16.mxu0 0
          %465 = vmatpush2.bf16.msra.mxu0 0
          %466 = vmatprep.subr.bf16.mxu0 0
          %467 = vmatpush2.bf16.msra.mxu0 0
          %468 = vmatprep.subr.bf16.mxu0 0
          %469 = vmatpush2.bf16.msra.mxu0 0
          %470 = vmatprep.subr.bf16.mxu0 0
          %471 = vmatpush2.bf16.msra.mxu0 0
          %472 = vmatprep.mubr.bf16.mxu0 0
          %473 = vmatmul.mubr.bf16.gmra.mxu0 %v381
          %v474 = vpop.f32.mrf.mxu0
          %v475 = vadd.f32 0.0, %v474
          %v476 = vpop.f32.mrf.mxu0
          %v477 = vpop.f32.mrf.mxu0
          %v478 = vpop.f32.mrf.mxu0
          %479 = vdwg.mxu0
          %v480 = vpack.c.bf16 %v475, %v475
          %v481 = vld [vmem:[#allocation2] sm:$0xf]
          %vm482 = vcmask 64512
          %v484 = vsel %vm482, %v481, 0
          %v487 = vsel %vm482, %v423, 0
          %489 = vmatprep.subr.bf16.mxu0 0
          %490 = vmatpush1.bf16.xpose.msra.mxu0 0
          %491 = vmatprep.subr.bf16.mxu0 0
          %492 = vmatpush1.bf16.xpose.msra.mxu0 0
          %493 = vmatprep.subr.bf16.mxu0 0
          %494 = vmatpush1.bf16.xpose.msra.mxu0 0
          %495 = vmatprep.subr.bf16.mxu0 0
          %496 = vmatpush1.bf16.xpose.msra.mxu0 0
          %497 = vmatprep.subr.bf16.mxu0 0
          %498 = vmatpush1.bf16.xpose.msra.mxu0 0
          %499 = vmatprep.subr.bf16.mxu0 0
          %500 = vmatpush1.bf16.xpose.msra.mxu0 0
          %501 = vmatprep.subr.bf16.mxu0 0
          %502 = vmatpush1.bf16.xpose.msra.mxu0 0
          %503 = vmatprep.subr.bf16.mxu0 0
          %504 = vmatpush1.bf16.xpose.msra.mxu0 %v487
          %505 = vmatprep.subr.bf16.mxu0 0
          %506 = vmatpush2.bf16.xpose.msra.mxu0 0
          %507 = vmatprep.subr.bf16.mxu0 0
          %508 = vmatpush2.bf16.xpose.msra.mxu0 0
          %509 = vmatprep.subr.bf16.mxu0 0
          %510 = vmatpush2.bf16.xpose.msra.mxu0 0
          %511 = vmatprep.subr.bf16.mxu0 0
          %512 = vmatpush2.bf16.xpose.msra.mxu0 0
          %513 = vmatprep.subr.bf16.mxu0 0
          %514 = vmatpush2.bf16.xpose.msra.mxu0 0
          %515 = vmatprep.subr.bf16.mxu0 0
          %516 = vmatpush2.bf16.xpose.msra.mxu0 0
          %517 = vmatprep.subr.bf16.mxu0 0
          %518 = vmatpush2.bf16.xpose.msra.mxu0 0
          %519 = vmatprep.subr.bf16.mxu0 0
          %520 = vmatpush2.bf16.xpose.msra.mxu0 0
          %521 = vmatprep.mubr.bf16.mxu0 0
          %522 = vmatmul.mubr.bf16.gmra.mxu0 %v484
          %v523 = vpop.f32.mrf.mxu0
          %v524 = vadd.f32 0.0, %v523
          %v525 = vpop.f32.mrf.mxu0
          %v526 = vpop.f32.mrf.mxu0
          %v527 = vpop.f32.mrf.mxu0
          %528 = vdwg.mxu0
          %v529 = vlaneseq
          %v530 = vshrl.u32 %v529, 7
          %v531 = vstv %s281
          %v532 = vadd.s32 %v531, %v530
          %v533 = vlaneseq
          %v534 = vand.u32 %v533, 127
          %v535 = vstv %s282
          %v536 = vadd.s32 %v535, %v534
          %vm537 = vcmp.le.s32.totalorder %v536, %v532
          %v538 = vsel %vm537, %v524, -1e+30
          %v539 = vld [vmem:[#allocation3] sm:$0xff]
          %v540 = vsel %vm482, %v538, -inf
          %541 = vmax.xlane.f32.xlu0 %v540
          %v542 = vpop.xlane.xlu0 %541
          %v543 = vmax.f32 %v539, %v542
          %v544 = vsub.f32 %v539, %v543
          %v545 = vmul.f32 %v544, 1.442695
          %v546 = vpow.pop %v545
          %548 = vset.pattern.permute.xlu0 0
          %549 = vperm.xlu0 %548, %v543
          %v550 = vpop.permute.xlu0 %549
          %v552 = vsub.f32 %v538, %v550
          %v553 = vmul.f32 %v552, 1.442695
          %v554 = vpow.pop %v553
          %v555 = vld [vmem:[#allocation4] sm:$0xff]
          %v556 = vmul.f32 %v546, %v555
          %v557 = vsel %vm482, %v554, 0.0
          %558 = vadd.xlane.f32.xlu0 %v557
          %v559 = vpop.xlane.xlu0 %558
          %v560 = vadd.f32 %v556, %v559
          %vm561 = vcmask 7168
          %562 = vst.msk [vmem:[#allocation4] sm:$0xff] %vm561, %v560
          %v563 = vld [vmem:[#allocation5] sm:$0xff]
          %565 = vset.pattern.permute.xlu0 0
          %566 = vperm.xlu0 %565, %v546
          %v567 = vpop.permute.xlu0 %566
          %v569 = vmul.f32 %v567, %v563
          %v570 = vpack.c.bf16 %v554, %v554
          %v572 = vsel %vm482, %v570, 0
          %vm574 = vcmask 1043456
          %v576 = vsel %vm574, %v480, 0
          %578 = vmatprep.subr.bf16.mxu0 0
          %579 = vmatpush1.bf16.msra.mxu0 0
          %580 = vmatprep.subr.bf16.mxu0 0
          %581 = vmatpush1.bf16.msra.mxu0 0
          %582 = vmatprep.subr.bf16.mxu0 0
          %583 = vmatpush1.bf16.msra.mxu0 0
          %584 = vmatprep.subr.bf16.mxu0 0
          %585 = vmatpush1.bf16.msra.mxu0 0
          %586 = vmatprep.subr.bf16.mxu0 0
          %587 = vmatpush1.bf16.msra.mxu0 0
          %588 = vmatprep.subr.bf16.mxu0 0
          %589 = vmatpush1.bf16.msra.mxu0 0
          %590 = vmatprep.subr.bf16.mxu0 0
          %591 = vmatpush1.bf16.msra.mxu0 0
          %592 = vmatprep.subr.bf16.mxu0 0
          %593 = vmatpush1.bf16.msra.mxu0 %v576
          %594 = vmatprep.subr.bf16.mxu0 0
          %595 = vmatpush2.bf16.msra.mxu0 0
          %596 = vmatprep.subr.bf16.mxu0 0
          %597 = vmatpush2.bf16.msra.mxu0 0
          %598 = vmatprep.subr.bf16.mxu0 0
          %599 = vmatpush2.bf16.msra.mxu0 0
          %600 = vmatprep.subr.bf16.mxu0 0
          %601 = vmatpush2.bf16.msra.mxu0 0
          %602 = vmatprep.subr.bf16.mxu0 0
          %603 = vmatpush2.bf16.msra.mxu0 0
          %604 = vmatprep.subr.bf16.mxu0 0
          %605 = vmatpush2.bf16.msra.mxu0 0
          %606 = vmatprep.subr.bf16.mxu0 0
          %607 = vmatpush2.bf16.msra.mxu0 0
          %608 = vmatprep.subr.bf16.mxu0 0
          %609 = vmatpush2.bf16.msra.mxu0 0
          %610 = vmatprep.mubr.bf16.mxu0 0
          %611 = vmatmul.mubr.bf16.gmra.mxu0 %v572
          %v612 = vpop.f32.mrf.mxu0
          %v613 = vadd.f32 0.0, %v612
          %v614 = vpop.f32.mrf.mxu0
          %v615 = vpop.f32.mrf.mxu0
          %v616 = vpop.f32.mrf.mxu0
          %617 = vdwg.mxu0
          %v618 = vadd.f32 %v569, %v613
          %619 = vst.msk [vmem:[#allocation5] sm:$0xff] %vm482, %v618
          %620 = vst.msk [vmem:[#allocation3] sm:$0xff] %vm561, %v543
        $region48: #{tpu_custom_call.1} parent=39 // pred_fallthru
          _
        // Predicated region
        $region49: #{tpu_custom_call.1} parent=39 // pred_check
          %p621 = pneg %p283
        $region50: #{tpu_custom_call.1} parent=39 // pred_check_branch
          %623 = sbr.rel (%p621) target = $region52
        $region51: #{tpu_custom_call.1} parent=39 // pred_region
          %v624 = vld [vmem:[#allocation4] sm:$0xff]
          %v625 = vrcp.pop %v624
          %v626 = vld [vmem:[#allocation5] sm:$0xff]
          %628 = vset.pattern.permute.xlu0 0
          %629 = vperm.xlu0 %628, %v625
          %v630 = vpop.permute.xlu0 %629
          %v632 = vmul.f32 %v626, %v630
          %vm633 = vcmask 64512
          %634 = vst.msk [vmem:[%s265] sm:$0xff] %vm633, %v632
        $region52: #{tpu_custom_call.1} parent=39 // pred_fallthru
          _
        %s635 = sand.u32 %s167, 1
        %s636 = scalar_lea.sflag [#allocation7], %s635
        %s637 = sand.u32 %s167, 1
        %s638 = smul.addr %s637, 8
        %s639 = scalar_lea.vmem [#allocation6], %s638
        // Predicated region
        $region53: #{tpu_custom_call.1} parent=39 // pred_check
          %p640 = pneg %p177
        $region54: #{tpu_custom_call.1} parent=39 // pred_check_branch
          %642 = sbr.rel (%p640) target = $region56
        $region55: #{tpu_custom_call.1} parent=39 // pred_region
          %s644 = ssub.s32 128, 128
          %645 = vsyncadd %s636, %s644
          %s646 = sadd.s32 %s25, %s24
          %s647 = smul.addr %s646, 128
          %s648 = scalar_lea.hbm %s5, %s647
          %s650 = sshll.u32 %s639, 4
          %s651 = int_to_ptr.vmem [resolvable:$true] %s650
          %653 = dma.vmem_to_hbm [thread:$0]  %s651, 128, %s648, %s636
        $region56: #{tpu_custom_call.1} parent=39 // pred_fallthru
          _
      $region40: #{tpu_custom_call.1} parent=5 // pred_fallthru
        _
      %p654 = scmp.le.s32.totalorder 2, %s14
      // Predicated region
      $region57: #{tpu_custom_call.1} parent=5 // pred_check
        %p655 = pneg %p654
      $region58: #{tpu_custom_call.1} parent=5 // pred_check_branch
        %657 = sbr.rel (%p655) target = $region60
      $region59: #{tpu_custom_call.1} parent=5 // pred_region
        %s658 = ssub.s32 %s14, 2
        // Predicated region
        $region61: #{tpu_custom_call.1} parent=59 // pred_check
          %p659 = pneg %p183
        $region62: #{tpu_custom_call.1} parent=59 // pred_check_branch
          %661 = sbr.rel (%p659) target = $region64
        $region63: #{tpu_custom_call.1} parent=59 // pred_region
          %s662 = sand.u32 %s168, 1
          %s663 = scalar_lea.sflag [#allocation7], %s662
          %s664 = sand.u32 %s168, 1
          %s665 = smul.addr %s664, 8
          %s666 = scalar_lea.vmem [#allocation6], %s665
          %667 = dma.done %s663, 128
        $region64: #{tpu_custom_call.1} parent=59 // pred_fallthru
          _
      $region60: #{tpu_custom_call.1} parent=5 // pred_fallthru
        _
    $region6: #{tpu_custom_call.1} parent=1 // loop_footer
      %s18 = sadd.s32 1, %s14
    $region7: #{tpu_custom_call.1} parent=1 // loop_footer_branch
      %13 = sbr.rel target = $region3
    $region8: #{tpu_custom_call.1} parent=1 // loop_exit
      _
    %668 = vsyncpa [#allocation7], 1
    %s669 = scalar_lea.sflag [#allocation7], 1
    %670 = vsyncpa %s669, 1

</llo_original>
